<compile_context>
chip_gen: v7x
topology: tpu7x:2x2x1
jax: 0.10.0
libtpu: 0.0.40
codegen_flags: <defaults>
</compile_context>

<pallas_src>
import functools

import jax
import jax.numpy as jnp
from jax.experimental import pallas as pl
from jax.experimental.pallas import tpu as pltpu

_LANE = 128
_SUB = 8
_BLOCK_ROWS_TARGET = 8192   # (8192, 128) f32 tile = 4 MiB per input per buffer


def _tensorcores_per_device() -> int:
    """TensorCores behind one JAX device: 2 on megacore/v7x-style chips, else 1."""
    try:
        kind = jax.devices()[0].device_kind.lower()
    except Exception:
        return 1
    # Single-TC-per-device chips first (v5e / v6e "lite" parts).
    if "lite" in kind or "v5e" in kind or "v6" in kind:
        return 1
    # Chips exposing 2 TensorCores behind one JAX device (v4/v5p megacore, v7x).
    if "v4" in kind or "v5p" in kind or "v7" in kind or "7x" in kind:
        return 2
    return 1


def _dice_bce_partial_kernel(x_ref, t_ref, o_ref, *,
                             blocks_per_core, num_blocks, valid_rows_last):
    c = pl.program_id(0)          # core-split index
    i = pl.program_id(1)          # block index within this core's range
    b = c * blocks_per_core + i   # global row-block id (may be >= num_blocks)

    # Zero this core's resident partial-sum block at the start of its range.
    @pl.when(i == 0)
    def _init():
        o_ref[...] = jnp.zeros_like(o_ref)

    x = x_ref[...].astype(jnp.float32)
    t = t_ref[...].astype(jnp.float32)

    # Sigmoid via tanh: 1 EUP op, no exp / abs / reciprocal / sign-select.
    p = 0.5 + 0.5 * jnp.tanh(0.5 * x)
    # Numerically-stable BCE-with-logits via the identity
    #   log1p(exp(-|x|)) = -log(sigmoid(|x|)) = -log(max(p, 1-p))   (arg >= 0.5)
    bce = jnp.maximum(x, 0.0) - x * t - jnp.log(jnp.maximum(p, 1.0 - p))

    pt = p * t
    ps = p + t

    br = x.shape[0]

    def _accum(bce_v, pt_v, ps_v):
        # Per-lane (8,128) partial sums: pure VALU vreg adds (no XLU reduce).
        o_ref[0, 0] += jnp.sum(bce_v.reshape(br // _SUB, _SUB, _LANE), axis=0)
        o_ref[0, 1] += jnp.sum(pt_v.reshape(br // _SUB, _SUB, _LANE), axis=0)
        o_ref[0, 2] += jnp.sum(ps_v.reshape(br // _SUB, _SUB, _LANE), axis=0)

    # Hot path: every block except the (possibly ragged) last real block.
    @pl.when(b < num_blocks - 1)
    def _body_full():
        _accum(bce, pt, ps)

    # Cold path: last real block — mask rows beyond the valid row count.
    # Keep jnp.where (select), NOT mask*value: OOB rows may hold Inf/NaN.
    @pl.when(b == num_blocks - 1)
    def _body_last():
        row = jax.lax.broadcasted_iota(jnp.int32, x.shape, 0)
        m = row < valid_rows_last
        _accum(jnp.where(m, bce, 0.0),
               jnp.where(m, pt, 0.0),
               jnp.where(m, ps, 0.0))
    # b > num_blocks - 1: phantom block from the core split — contributes 0.


def _partial_sums(x2, t2, R):
    """Run the Pallas streaming reduction over lane-dense (R, 128) views."""
    ncores = _tensorcores_per_device()

    # Multiple of 16 so bf16 (16,128) sublane packing is also satisfied.
    block_rows = min(_BLOCK_ROWS_TARGET, ((R + 15) // 16) * 16)
    num_blocks = pl.cdiv(R, block_rows)
    blocks_per_core = pl.cdiv(num_blocks, ncores)
    valid_rows_last = R - (num_blocks - 1) * block_rows

    kernel = functools.partial(
        _dice_bce_partial_kernel,
        blocks_per_core=blocks_per_core,
        num_blocks=num_blocks,
        valid_rows_last=valid_rows_last,
    )
    # TODO(synk): if input shapes vary run-to-run, move these statics into SMEM
    # scalars via pltpu.PrefetchScalarGridSpec to avoid per-shape recompiles.

    def in_map(c, i):
        # Clamp phantom blocks (core-split remainder) to the last real block;
        # the kernel skips their accumulation entirely.
        return (jnp.minimum(c * blocks_per_core + i, num_blocks - 1), 0)

    itemsize = max(jnp.dtype(x2.dtype).itemsize, jnp.dtype(t2.dtype).itemsize)
    # 2 inputs x 2 pipeline buffers of the tile, plus headroom for the output
    # block and Mosaic-internal scratch.  Raised above defaults so 8192-row
    # f32 tiles fit on v5e/v6e; well under physical VMEM on every chip.
    vmem_limit = int(min(100 << 20,
                         max(32 << 20,
                             4 * block_rows * _LANE * itemsize + (8 << 20))))

    parts = pl.pallas_call(
        kernel,
        out_shape=jax.ShapeDtypeStruct((ncores, 3, _SUB, _LANE), jnp.float32),
        grid=(ncores, blocks_per_core),
        in_specs=[
            pl.BlockSpec((block_rows, _LANE), in_map),
            pl.BlockSpec((block_rows, _LANE), in_map),
        ],
        out_specs=pl.BlockSpec((1, 3, _SUB, _LANE), lambda c, i: (c, 0, 0, 0)),
        compiler_params=pltpu.CompilerParams(
            # TODO(synk): on v7x verify in the profile that the leading axis
            # actually lands on both TensorCores; if one TC is idle, switch it
            # to pltpu.CORE_PARALLEL.
            dimension_semantics=("parallel", "arbitrary"),
            vmem_limit_bytes=vmem_limit),
    )(x2, t2)

    return jnp.sum(parts[:, 0]), jnp.sum(parts[:, 1]), jnp.sum(parts[:, 2])


def dice_bce_loss(inputs, targets, smooth=1.0):
    """Pallas TPU implementation of DiceBCELoss.forward (reduction='mean')."""
    n_valid = int(inputs.size)

    x_flat = inputs.reshape(-1)
    t_flat = targets.reshape(-1)

    R = n_valid // _LANE          # full 128-lane rows streamed by the kernel
    n_main = R * _LANE
    tail = n_valid - n_main       # < 128 leftover elements (handled in jnp)

    bce_sum = jnp.float32(0.0)
    intersection = jnp.float32(0.0)
    p_plus_t_sum = jnp.float32(0.0)

    if R > 0:
        if tail == 0:
            x_main, t_main = x_flat, t_flat          # reshape only: no HBM copy
        else:
            x_main = jax.lax.slice(x_flat, (0,), (n_main,))
            t_main = jax.lax.slice(t_flat, (0,), (n_main,))
        b, it, s = _partial_sums(x_main.reshape(R, _LANE),
                                 t_main.reshape(R, _LANE), R)
        bce_sum = bce_sum + b
        intersection = intersection + it
        p_plus_t_sum = p_plus_t_sum + s

    if tail > 0:
        # Tiny (<128 element) tail: plain jnp, avoids any padded HBM copy.
        xt = jax.lax.slice(x_flat, (n_main,), (n_valid,)).astype(jnp.float32)
        tt = jax.lax.slice(t_flat, (n_main,), (n_valid,)).astype(jnp.float32)
        bce_sum = bce_sum + jnp.sum(
            jnp.maximum(xt, 0.0) - xt * tt + jnp.log1p(jnp.exp(-jnp.abs(xt))))
        pt = jax.nn.sigmoid(xt)
        intersection = intersection + jnp.sum(pt * tt)
        p_plus_t_sum = p_plus_t_sum + jnp.sum(pt + tt)

    smooth = jnp.float32(smooth)
    bce_mean = bce_sum / jnp.float32(n_valid)
    dice_loss = 1.0 - (2.0 * intersection + smooth) / (p_plus_t_sum + smooth)
    return bce_mean + dice_loss


def _reference(inputs, targets, smooth=1.0):
    # Pure-JAX reference mirroring the PyTorch forward.
    x = inputs.astype(jnp.float32)
    t = targets.astype(jnp.float32)
    bce = jnp.mean(jnp.maximum(x, 0.0) - x * t + jnp.log1p(jnp.exp(-jnp.abs(x))))
    p = jax.nn.sigmoid(x).reshape(-1)
    tf = t.reshape(-1)
    inter = jnp.sum(p * tf)
    dice = 1.0 - (2.0 * inter + smooth) / (jnp.sum(p) + jnp.sum(tf) + smooth)
    return bce + dice


if __name__ == "__main__":
    key = jax.random.PRNGKey(0)
    k1, k2 = jax.random.split(key)

    # Small shapes consistent with a segmentation logits/targets pair (NCHW).
    shape = (2, 4, 16, 16)
    inputs = jax.random.normal(k1, shape, dtype=jnp.float32)              # logits
    targets = (jax.random.uniform(k2, shape) > 0.5).astype(jnp.float32)   # binary mask

    loss = dice_bce_loss(inputs, targets, smooth=1.0)
    loss = jax.block_until_ready(loss)

    ref = jax.block_until_ready(_reference(inputs, targets, smooth=1.0))
    assert jnp.allclose(loss, ref, rtol=1e-5, atol=1e-5), (loss, ref)

    print("KERNEL_OK")
</pallas_src>

<mosaic_0001>
module attributes {stable_mosaic.version = 11 : i64} {
  func.func @_dice_bce_partial_kernel(%arg0: i32, %arg1: i32, %arg2: memref<16x128xf32, #tpu.memory_space<vmem>>, %arg3: memref<16x128xf32, #tpu.memory_space<vmem>>, %arg4: memref<1x3x8x128xf32, #tpu.memory_space<vmem>>) attributes {dimension_semantics = [#tpu.dimension_semantics<parallel>, #tpu.dimension_semantics<arbitrary>], iteration_bounds = array<i64: 1, 1>, scalar_prefetch = 0 : i64, scratch_operands = 0 : i64, tpu.core_type = #tpu.core_type<tc>, window_params = [{transform_indices = @transform_0, window_bounds = array<i64: 16, 128>}, {transform_indices = @transform_1, window_bounds = array<i64: 16, 128>}, {transform_indices = @transform_2, window_bounds = array<i64: 1, 3, 8, 128>}]} {
    %c1_i32 = arith.constant 1 : i32
    %0 = arith.muli %arg0, %c1_i32 : i32
    %1 = arith.addi %0, %arg1 : i32
    %c0_i32 = arith.constant 0 : i32
    %2 = arith.cmpi eq, %arg1, %c0_i32 : i32
    %3 = arith.extui %2 : i1 to i32
    %c0_i32_0 = arith.constant 0 : i32
    %4 = arith.cmpi ne, %3, %c0_i32_0 : i32
    scf.if %4 {
      %cst_12 = arith.constant 0.000000e+00 : f32
      %31 = vector.broadcast %cst_12 : f32 to vector<1x3x8x128xf32>
      %c0_13 = arith.constant 0 : index
      %c0_14 = arith.constant 0 : index
      %c0_15 = arith.constant 0 : index
      %c0_16 = arith.constant 0 : index
      %32 = vector.load %arg4[%c0_13, %c0_14, %c0_15, %c0_16] : memref<1x3x8x128xf32, #tpu.memory_space<vmem>>, vector<1x3x8x128xf32>
      tpu.vector_store %arg4[%c0_13, %c0_14, %c0_15, %c0_16], %31 {strides = array<i32>} : memref<1x3x8x128xf32, #tpu.memory_space<vmem>>, vector<1x3x8x128xf32>,
    } else {
    }
    %c0 = arith.constant 0 : index
    %c0_1 = arith.constant 0 : index
    %5 = vector.load %arg2[%c0, %c0_1] : memref<16x128xf32, #tpu.memory_space<vmem>>, vector<16x128xf32>
    %c0_2 = arith.constant 0 : index
    %c0_3 = arith.constant 0 : index
    %6 = vector.load %arg3[%c0_2, %c0_3] : memref<16x128xf32, #tpu.memory_space<vmem>>, vector<16x128xf32>
    %cst = arith.constant 5.000000e-01 : f32
    %7 = vector.broadcast %cst : f32 to vector<16x128xf32>
    %8 = arith.mulf %7, %5 : vector<16x128xf32>
    %9 = math.tanh %8 : vector<16x128xf32>
    %cst_4 = arith.constant 5.000000e-01 : f32
    %10 = vector.broadcast %cst_4 : f32 to vector<16x128xf32>
    %11 = arith.mulf %10, %9 : vector<16x128xf32>
    %cst_5 = arith.constant 5.000000e-01 : f32
    %12 = vector.broadcast %cst_5 : f32 to vector<16x128xf32>
    %13 = arith.addf %12, %11 : vector<16x128xf32>
    %cst_6 = arith.constant 0.000000e+00 : f32
    %14 = vector.broadcast %cst_6 : f32 to vector<16x128xf32>
    %15 = arith.maximumf %5, %14 : vector<16x128xf32>
    %16 = arith.mulf %5, %6 : vector<16x128xf32>
    %17 = arith.subf %15, %16 : vector<16x128xf32>
    %cst_7 = arith.constant 1.000000e+00 : f32
    %18 = vector.broadcast %cst_7 : f32 to vector<16x128xf32>
    %19 = arith.subf %18, %13 : vector<16x128xf32>
    %20 = arith.maximumf %13, %19 : vector<16x128xf32>
    %21 = math.log %20 : vector<16x128xf32>
    %22 = arith.subf %17, %21 : vector<16x128xf32>
    %23 = arith.mulf %13, %6 : vector<16x128xf32>
    %24 = arith.addf %13, %6 : vector<16x128xf32>
    %c0_i32_8 = arith.constant 0 : i32
    %25 = arith.cmpi slt, %1, %c0_i32_8 : i32
    %26 = arith.extui %25 : i1 to i32
    %c0_i32_9 = arith.constant 0 : i32
    %27 = arith.cmpi ne, %26, %c0_i32_9 : i32
    scf.if %27 {
      %c0_12 = arith.constant 0 : index
      %c0_13 = arith.constant 0 : index
      %c0_14 = arith.constant 0 : index
      %c0_15 = arith.constant 0 : index
      %31 = vector.load %arg4[%c0_12, %c0_13, %c0_14, %c0_15] : memref<1x3x8x128xf32, #tpu.memory_space<vmem>>, vector<1x1x8x128xf32>
      %32 = vector.shape_cast %31 : vector<1x1x8x128xf32> to vector<8x128xf32>
      %33 = vector.shape_cast %22 : vector<16x128xf32> to vector<2x8x128xf32>
      %cst_16 = arith.constant dense<0.000000e+00> : vector<8x128xf32>
      %34 = vector.multi_reduction <add>, %33, %cst_16 [0] : vector<2x8x128xf32> to vector<8x128xf32>
      %35 = arith.addf %32, %34 : vector<8x128xf32>
      %c0_17 = arith.constant 0 : index
      %c0_18 = arith.constant 0 : index
      %c0_19 = arith.constant 0 : index
      %c0_20 = arith.constant 0 : index
      %36 = vector.load %arg4[%c0_17, %c0_18, %c0_19, %c0_20] : memref<1x3x8x128xf32, #tpu.memory_space<vmem>>, vector<1x1x8x128xf32>
      %37 = vector.shape_cast %36 : vector<1x1x8x128xf32> to vector<8x128xf32>
      %38 = vector.shape_cast %35 : vector<8x128xf32> to vector<1x1x8x128xf32>
      tpu.vector_store %arg4[%c0_17, %c0_18, %c0_19, %c0_20], %38 {strides = array<i32>} : memref<1x3x8x128xf32, #tpu.memory_space<vmem>>, vector<1x1x8x128xf32>,
      %c0_21 = arith.constant 0 : index
      %c1 = arith.constant 1 : index
      %c0_22 = arith.constant 0 : index
      %c0_23 = arith.constant 0 : index
      %39 = vector.load %arg4[%c0_21, %c1, %c0_22, %c0_23] : memref<1x3x8x128xf32, #tpu.memory_space<vmem>>, vector<1x1x8x128xf32>
      %40 = vector.shape_cast %39 : vector<1x1x8x128xf32> to vector<8x128xf32>
      %41 = vector.shape_cast %23 : vector<16x128xf32> to vector<2x8x128xf32>
      %cst_24 = arith.constant dense<0.000000e+00> : vector<8x128xf32>
      %42 = vector.multi_reduction <add>, %41, %cst_24 [0] : vector<2x8x128xf32> to vector<8x128xf32>
      %43 = arith.addf %40, %42 : vector<8x128xf32>
      %c0_25 = arith.constant 0 : index
      %c1_26 = arith.constant 1 : index
      %c0_27 = arith.constant 0 : index
      %c0_28 = arith.constant 0 : index
      %44 = vector.load %arg4[%c0_25, %c1_26, %c0_27, %c0_28] : memref<1x3x8x128xf32, #tpu.memory_space<vmem>>, vector<1x1x8x128xf32>
      %45 = vector.shape_cast %44 : vector<1x1x8x128xf32> to vector<8x128xf32>
      %46 = vector.shape_cast %43 : vector<8x128xf32> to vector<1x1x8x128xf32>
      tpu.vector_store %arg4[%c0_25, %c1_26, %c0_27, %c0_28], %46 {strides = array<i32>} : memref<1x3x8x128xf32, #tpu.memory_space<vmem>>, vector<1x1x8x128xf32>,
      %c0_29 = arith.constant 0 : index
      %c2 = arith.constant 2 : index
      %c0_30 = arith.constant 0 : index
      %c0_31 = arith.constant 0 : index
      %47 = vector.load %arg4[%c0_29, %c2, %c0_30, %c0_31] : memref<1x3x8x128xf32, #tpu.memory_space<vmem>>, vector<1x1x8x128xf32>
      %48 = vector.shape_cast %47 : vector<1x1x8x128xf32> to vector<8x128xf32>
      %49 = vector.shape_cast %24 : vector<16x128xf32> to vector<2x8x128xf32>
      %cst_32 = arith.constant dense<0.000000e+00> : vector<8x128xf32>
      %50 = vector.multi_reduction <add>, %49, %cst_32 [0] : vector<2x8x128xf32> to vector<8x128xf32>
      %51 = arith.addf %48, %50 : vector<8x128xf32>
      %c0_33 = arith.constant 0 : index
      %c2_34 = arith.constant 2 : index
      %c0_35 = arith.constant 0 : index
      %c0_36 = arith.constant 0 : index
      %52 = vector.load %arg4[%c0_33, %c2_34, %c0_35, %c0_36] : memref<1x3x8x128xf32, #tpu.memory_space<vmem>>, vector<1x1x8x128xf32>
      %53 = vector.shape_cast %52 : vector<1x1x8x128xf32> to vector<8x128xf32>
      %54 = vector.shape_cast %51 : vector<8x128xf32> to vector<1x1x8x128xf32>
      tpu.vector_store %arg4[%c0_33, %c2_34, %c0_35, %c0_36], %54 {strides = array<i32>} : memref<1x3x8x128xf32, #tpu.memory_space<vmem>>, vector<1x1x8x128xf32>,
    } else {
    }
    %c0_i32_10 = arith.constant 0 : i32
    %28 = arith.cmpi eq, %1, %c0_i32_10 : i32
    %29 = arith.extui %28 : i1 to i32
    %c0_i32_11 = arith.constant 0 : i32
    %30 = arith.cmpi ne, %29, %c0_i32_11 : i32
    scf.if %30 {
      %31 = tpu.iota {dimensions = array<i32: 0>} : vector<16x128xi32>
      %c16_i32 = arith.constant 16 : i32
      %32 = vector.broadcast %c16_i32 : i32 to vector<16x128xi32>
      %33 = arith.cmpi slt, %31, %32 : vector<16x128xi32>
      %cst_12 = arith.constant 0.000000e+00 : f32
      %34 = vector.broadcast %cst_12 : f32 to vector<16x128xf32>
      %35 = arith.select %33, %22, %34 : vector<16x128xi1>, vector<16x128xf32>
      %cst_13 = arith.constant 0.000000e+00 : f32
      %36 = vector.broadcast %cst_13 : f32 to vector<16x128xf32>
      %37 = arith.select %33, %23, %36 : vector<16x128xi1>, vector<16x128xf32>
      %cst_14 = arith.constant 0.000000e+00 : f32
      %38 = vector.broadcast %cst_14 : f32 to vector<16x128xf32>
      %39 = arith.select %33, %24, %38 : vector<16x128xi1>, vector<16x128xf32>
      %c0_15 = arith.constant 0 : index
      %c0_16 = arith.constant 0 : index
      %c0_17 = arith.constant 0 : index
      %c0_18 = arith.constant 0 : index
      %40 = vector.load %arg4[%c0_15, %c0_16, %c0_17, %c0_18] : memref<1x3x8x128xf32, #tpu.memory_space<vmem>>, vector<1x1x8x128xf32>
      %41 = vector.shape_cast %40 : vector<1x1x8x128xf32> to vector<8x128xf32>
      %42 = vector.shape_cast %35 : vector<16x128xf32> to vector<2x8x128xf32>
      %cst_19 = arith.constant dense<0.000000e+00> : vector<8x128xf32>
      %43 = vector.multi_reduction <add>, %42, %cst_19 [0] : vector<2x8x128xf32> to vector<8x128xf32>
      %44 = arith.addf %41, %43 : vector<8x128xf32>
      %c0_20 = arith.constant 0 : index
      %c0_21 = arith.constant 0 : index
      %c0_22 = arith.constant 0 : index
      %c0_23 = arith.constant 0 : index
      %45 = vector.load %arg4[%c0_20, %c0_21, %c0_22, %c0_23] : memref<1x3x8x128xf32, #tpu.memory_space<vmem>>, vector<1x1x8x128xf32>
      %46 = vector.shape_cast %45 : vector<1x1x8x128xf32> to vector<8x128xf32>
      %47 = vector.shape_cast %44 : vector<8x128xf32> to vector<1x1x8x128xf32>
      tpu.vector_store %arg4[%c0_20, %c0_21, %c0_22, %c0_23], %47 {strides = array<i32>} : memref<1x3x8x128xf32, #tpu.memory_space<vmem>>, vector<1x1x8x128xf32>,
      %c0_24 = arith.constant 0 : index
      %c1 = arith.constant 1 : index
      %c0_25 = arith.constant 0 : index
      %c0_26 = arith.constant 0 : index
      %48 = vector.load %arg4[%c0_24, %c1, %c0_25, %c0_26] : memref<1x3x8x128xf32, #tpu.memory_space<vmem>>, vector<1x1x8x128xf32>
      %49 = vector.shape_cast %48 : vector<1x1x8x128xf32> to vector<8x128xf32>
      %50 = vector.shape_cast %37 : vector<16x128xf32> to vector<2x8x128xf32>
      %cst_27 = arith.constant dense<0.000000e+00> : vector<8x128xf32>
      %51 = vector.multi_reduction <add>, %50, %cst_27 [0] : vector<2x8x128xf32> to vector<8x128xf32>
      %52 = arith.addf %49, %51 : vector<8x128xf32>
      %c0_28 = arith.constant 0 : index
      %c1_29 = arith.constant 1 : index
      %c0_30 = arith.constant 0 : index
      %c0_31 = arith.constant 0 : index
      %53 = vector.load %arg4[%c0_28, %c1_29, %c0_30, %c0_31] : memref<1x3x8x128xf32, #tpu.memory_space<vmem>>, vector<1x1x8x128xf32>
      %54 = vector.shape_cast %53 : vector<1x1x8x128xf32> to vector<8x128xf32>
      %55 = vector.shape_cast %52 : vector<8x128xf32> to vector<1x1x8x128xf32>
      tpu.vector_store %arg4[%c0_28, %c1_29, %c0_30, %c0_31], %55 {strides = array<i32>} : memref<1x3x8x128xf32, #tpu.memory_space<vmem>>, vector<1x1x8x128xf32>,
      %c0_32 = arith.constant 0 : index
      %c2 = arith.constant 2 : index
      %c0_33 = arith.constant 0 : index
      %c0_34 = arith.constant 0 : index
      %56 = vector.load %arg4[%c0_32, %c2, %c0_33, %c0_34] : memref<1x3x8x128xf32, #tpu.memory_space<vmem>>, vector<1x1x8x128xf32>
      %57 = vector.shape_cast %56 : vector<1x1x8x128xf32> to vector<8x128xf32>
      %58 = vector.shape_cast %39 : vector<16x128xf32> to vector<2x8x128xf32>
      %cst_35 = arith.constant dense<0.000000e+00> : vector<8x128xf32>
      %59 = vector.multi_reduction <add>, %58, %cst_35 [0] : vector<2x8x128xf32> to vector<8x128xf32>
      %60 = arith.addf %57, %59 : vector<8x128xf32>
      %c0_36 = arith.constant 0 : index
      %c2_37 = arith.constant 2 : index
      %c0_38 = arith.constant 0 : index
      %c0_39 = arith.constant 0 : index
      %61 = vector.load %arg4[%c0_36, %c2_37, %c0_38, %c0_39] : memref<1x3x8x128xf32, #tpu.memory_space<vmem>>, vector<1x1x8x128xf32>
      %62 = vector.shape_cast %61 : vector<1x1x8x128xf32> to vector<8x128xf32>
      %63 = vector.shape_cast %60 : vector<8x128xf32> to vector<1x1x8x128xf32>
      tpu.vector_store %arg4[%c0_36, %c2_37, %c0_38, %c0_39], %63 {strides = array<i32>} : memref<1x3x8x128xf32, #tpu.memory_space<vmem>>, vector<1x1x8x128xf32>,
    } else {
    }
    return
  }
  func.func @transform_0(%arg0: i32, %arg1: i32) -> (i32, i32) {
    %c1_i32 = arith.constant 1 : i32
    %0 = arith.muli %arg0, %c1_i32 : i32
    %1 = arith.addi %0, %arg1 : i32
    %c0_i32 = arith.constant 0 : i32
    %2 = arith.minsi %1, %c0_i32 : i32
    %c0_i32_0 = arith.constant 0 : i32
    %c0_i32_1 = arith.constant 0 : i32
    return %2, %c0_i32_0 : i32, i32
  }
  func.func @transform_1(%arg0: i32, %arg1: i32) -> (i32, i32) {
    %c1_i32 = arith.constant 1 : i32
    %0 = arith.muli %arg0, %c1_i32 : i32
    %1 = arith.addi %0, %arg1 : i32
    %c0_i32 = arith.constant 0 : i32
    %2 = arith.minsi %1, %c0_i32 : i32
    %c0_i32_0 = arith.constant 0 : i32
    %c0_i32_1 = arith.constant 0 : i32
    return %2, %c0_i32_0 : i32, i32
  }
  func.func @transform_2(%arg0: i32, %arg1: i32) -> (i32, i32, i32, i32) {
    %c0_i32 = arith.constant 0 : i32
    %c0_i32_0 = arith.constant 0 : i32
    %c0_i32_1 = arith.constant 0 : i32
    %c0_i32_2 = arith.constant 0 : i32
    return %arg0, %c0_i32, %c0_i32_0, %c0_i32_1 : i32, i32, i32, i32
  }
}

</mosaic_0001>

<llo_original>
// kernel: tpu_custom_call.1
$region0: #{tpu_custom_call.1}
  #allocation0 [shape = 'u32[]', space=smem, size = 0x4, offset = 0x4, fixed_abs, tag = 'smem constant byte address 0x4 - core index']
  #allocation1 [shape = 'u32[144,128]{1,0:T(1,128)}', space=vmem, size = 0x12000, scoped, tag = 'internal scratch']
  %s0 = inlined_call_operand.hbm [shape: f32[16,128], index: 0, kind: input, shape index: {}]
  %s1 = inlined_call_operand.hbm [shape: f32[16,128], index: 1, kind: input, shape index: {}]
  %s2 = inlined_call_operand.hbm [shape: f32[1,3,8,128], index: 2, kind: output, shape index: {}]
  %s3 = sld [smem:[#allocation0]]
  $region38: #{tpu_custom_call.1} parent=0
    _
  %s5 = ssub.s32 1, %s3
  %s6 = scalar_select 0, %s5, %s3
  $region1: #{tpu_custom_call.1} parent=0
    #allocation2 [shape = 'u8[8192]{0}', space=vmem, size = 0x2000, scoped, tag = 'input window, operand 0, single buffered']
    #allocation3 [shape = 's32[1]{0}', space=sflag, size = 0x4, scoped, tag = 'scoped memory for tpu_custom_call.1']
    #allocation4 [shape = 's32[1]{0}', space=sflag, size = 0x4, scoped, tag = 'scoped memory for tpu_custom_call.1']
    #allocation5 [shape = 'u8[8192]{0}', space=vmem, size = 0x2000, scoped, tag = 'input window, operand 1, single buffered']
    #allocation6 [shape = 's32[1]{0}', space=sflag, size = 0x4, scoped, tag = 'scoped memory for tpu_custom_call.1']
    #allocation7 [shape = 'u8[12288]{0}', space=vmem, size = 0x3000, scoped, tag = 'output window, operand 0, single buffered']
    %7 = vsyncpa [#allocation3], 0
    %8 = vsyncpa [#allocation6], 0
    %9 = vsyncpa [#allocation4], 0
    // Predicated region
    $region2: #{tpu_custom_call.1} parent=1 // pred_check
      _
    $region3: #{tpu_custom_call.1} parent=1 // pred_check_branch
      %11 = sbr.rel (0) target = $region5
    $region4: #{tpu_custom_call.1} parent=1 // pred_region
      %s12 = sadd.s32 0, 0
      %p13 = scmp.lt.s32.totalorder %s12, 0
      %s14 = scalar_select %p13, %s12, 0
      %s15 = smul.u32 2, %s14
      %s17 = ssub.s32 256, 256
      %18 = vsyncadd [#allocation3], %s17
      %s19 = smul.addr %s15, 128
      %s20 = scalar_lea.hbm %s0, %s19
      %s21 = sshll.u32 [#allocation2], 4
      %s22 = int_to_ptr.vmem [resolvable:$true] %s21
      %27 = dma.hbm_to_vmem [thread:$0]  %s20, 256, %s22, [#allocation3], 128, 128, 8
    $region5: #{tpu_custom_call.1} parent=1 // pred_fallthru
      _
    // Predicated region
    $region6: #{tpu_custom_call.1} parent=1 // pred_check
      _
    $region7: #{tpu_custom_call.1} parent=1 // pred_check_branch
      %29 = sbr.rel (0) target = $region9
    $region8: #{tpu_custom_call.1} parent=1 // pred_region
      %s30 = sadd.s32 0, 0
      %p31 = scmp.lt.s32.totalorder %s30, 0
      %s32 = scalar_select %p31, %s30, 0
      %s33 = smul.u32 2, %s32
      %s35 = ssub.s32 256, 256
      %36 = vsyncadd [#allocation6], %s35
      %s37 = smul.addr %s33, 128
      %s38 = scalar_lea.hbm %s1, %s37
      %s39 = sshll.u32 [#allocation5], 4
      %s40 = int_to_ptr.vmem [resolvable:$true] %s39
      %45 = dma.hbm_to_vmem [thread:$0]  %s38, 256, %s40, [#allocation6], 128, 128, 8
    $region9: #{tpu_custom_call.1} parent=1 // pred_fallthru
      _
    // Predicated region
    $region10: #{tpu_custom_call.1} parent=1 // pred_check
      _
    $region11: #{tpu_custom_call.1} parent=1 // pred_check_branch
      %47 = sbr.rel (0) target = $region13
    $region12: #{tpu_custom_call.1} parent=1 // pred_region
      %48 = dma.done [#allocation3], 256
    $region13: #{tpu_custom_call.1} parent=1 // pred_fallthru
      _
    // Predicated region
    $region14: #{tpu_custom_call.1} parent=1 // pred_check
      _
    $region15: #{tpu_custom_call.1} parent=1 // pred_check_branch
      %50 = sbr.rel (0) target = $region17
    $region16: #{tpu_custom_call.1} parent=1 // pred_region
      %51 = dma.done [#allocation6], 256
    $region17: #{tpu_custom_call.1} parent=1 // pred_fallthru
      _
    %s52 = sadd.s32 0, 0
    %p53 = scmp.lt.s32.totalorder %s52, 0
    %s54 = scalar_select %p53, %s52, 0
    %s55 = smul.u32 2, %s54
    %s56 = sadd.s32 0, 0
    %p57 = scmp.lt.s32.totalorder %s56, 0
    %s58 = scalar_select %p57, %s56, 0
    %s59 = smul.u32 2, %s58
    %s60 = sadd.s32 0, 0
    %p61 = scmp.eq.s32.totalorder 0, 0
    // Predicated region
    $region18: #{tpu_custom_call.1} parent=1 // pred_check
      %p62 = pneg %p61
    $region19: #{tpu_custom_call.1} parent=1 // pred_check_branch
      %64 = sbr.rel (%p62) target = $region21
    $region20: #{tpu_custom_call.1} parent=1 // pred_region
      %65 = vst [vmem:[#allocation7] sm:$0xff] 0.0
      %66 = vst [vmem:[#allocation7 + $0x8] sm:$0xff] 0.0
      %67 = vst [vmem:[#allocation7 + $0x10] sm:$0xff] 0.0
    $region21: #{tpu_custom_call.1} parent=1 // pred_fallthru
      _
    %v68 = vld [vmem:[#allocation2] sm:$0xff]
    %v69 = vld [vmem:[#allocation2 + $0x8] sm:$0xff]
    %v70 = vld [vmem:[#allocation5] sm:$0xff]
    %v71 = vld [vmem:[#allocation5 + $0x8] sm:$0xff]
    %v72 = vmul.f32 %v68, 0.5
    %v73 = vmul.f32 %v69, 0.5
    %v74 = vtanh.pop %v72
    %v75 = vtanh.pop %v73
    %v76 = vmul.f32 %v74, 0.5
    %v77 = vmul.f32 %v75, 0.5
    %v78 = vadd.f32 %v76, 0.5
    %v79 = vadd.f32 %v77, 0.5
    %v80 = vmax.f32 %v68, 0.0
    %v81 = vmax.f32 %v69, 0.0
    %v82 = vmul.f32 %v68, %v70
    %v83 = vmul.f32 %v69, %v71
    %v84 = vsub.f32 %v80, %v82
    %v85 = vsub.f32 %v81, %v83
    %v86 = vsub.f32 1.0, %v78
    %v87 = vsub.f32 1.0, %v79
    %v88 = vmax.f32 %v78, %v86
    %v89 = vmax.f32 %v79, %v87
    %v90 = vlog2.pop %v88
    %v91 = vmul.f32 %v90, 0.6931472
    %v92 = vlog2.pop %v89
    %v93 = vmul.f32 %v92, 0.6931472
    %v94 = vsub.f32 %v84, %v91
    %v95 = vsub.f32 %v85, %v93
    %v96 = vmul.f32 %v78, %v70
    %v97 = vmul.f32 %v79, %v71
    %v98 = vadd.f32 %v78, %v70
    %v99 = vadd.f32 %v79, %v71
    %p100 = scmp.lt.s32.totalorder %s60, 0
    // Predicated region
    $region22: #{tpu_custom_call.1} parent=1 // pred_check
      %p101 = pneg %p100
    $region23: #{tpu_custom_call.1} parent=1 // pred_check_branch
      %103 = sbr.rel (%p101) target = $region25
    $region24: #{tpu_custom_call.1} parent=1 // pred_region
      %v104 = vld [vmem:[#allocation7] sm:$0xff]
      %v105 = vadd.f32 %v94, %v95
      %v106 = vadd.f32 %v104, %v105
      %107 = vst [vmem:[#allocation7] sm:$0xff] %v106
      %s108 = scalar_lea.vmem [#allocation7], 8
      %v109 = vld [vmem:[%s108] sm:$0xff]
      %v110 = vadd.f32 %v96, %v97
      %v111 = vadd.f32 %v109, %v110
      %112 = vst [vmem:[%s108] sm:$0xff] %v111
      %s113 = scalar_lea.vmem [#allocation7], 16
      %v114 = vld [vmem:[%s113] sm:$0xff]
      %v115 = vadd.f32 %v98, %v99
      %v116 = vadd.f32 %v114, %v115
      %117 = vst [vmem:[%s113] sm:$0xff] %v116
    $region25: #{tpu_custom_call.1} parent=1 // pred_fallthru
      _
    %p118 = scmp.eq.s32.totalorder %s60, 0
    // Predicated region
    $region26: #{tpu_custom_call.1} parent=1 // pred_check
      %p119 = pneg %p118
    $region27: #{tpu_custom_call.1} parent=1 // pred_check_branch
      %121 = sbr.rel (%p119) target = $region29
    $region28: #{tpu_custom_call.1} parent=1 // pred_region
      %v122 = vlaneseq
      %v123 = vshrl.u32 %v122, 7
      %v124 = vadd.s32 %v123, 8
      %vm125 = vcmp.lt.s32.totalorder %v123, 16
      %vm126 = vcmp.lt.s32.totalorder %v124, 16
      %v127 = vsel %vm125, %v94, 0.0
      %v128 = vsel %vm126, %v95, 0.0
      %v129 = vsel %vm125, %v96, 0.0
      %v130 = vsel %vm126, %v97, 0.0
      %v131 = vsel %vm125, %v98, 0.0
      %v132 = vsel %vm126, %v99, 0.0
      %v133 = vld [vmem:[#allocation7] sm:$0xff]
      %v134 = vadd.f32 %v127, %v128
      %v135 = vadd.f32 %v133, %v134
      %136 = vst [vmem:[#allocation7] sm:$0xff] %v135
      %s137 = scalar_lea.vmem [#allocation7], 8
      %v138 = vld [vmem:[%s137] sm:$0xff]
      %v139 = vadd.f32 %v129, %v130
      %v140 = vadd.f32 %v138, %v139
      %141 = vst [vmem:[%s137] sm:$0xff] %v140
      %s142 = scalar_lea.vmem [#allocation7], 16
      %v143 = vld [vmem:[%s142] sm:$0xff]
      %v144 = vadd.f32 %v131, %v132
      %v145 = vadd.f32 %v143, %v144
      %146 = vst [vmem:[%s142] sm:$0xff] %v145
    $region29: #{tpu_custom_call.1} parent=1 // pred_fallthru
      _
    // Predicated region
    $region30: #{tpu_custom_call.1} parent=1 // pred_check
      _
    $region31: #{tpu_custom_call.1} parent=1 // pred_check_branch
      %148 = sbr.rel (0) target = $region33
    $region32: #{tpu_custom_call.1} parent=1 // pred_region
      %s150 = ssub.s32 384, 384
      %151 = vsyncadd [#allocation4], %s150
      %s152 = sshll.u32 [#allocation7], 4
      %s153 = int_to_ptr.vmem [resolvable:$true] %s152
      %158 = dma.vmem_to_hbm [thread:$0]  %s153, 384, %s2, [#allocation4], 128, 128, 8
    $region33: #{tpu_custom_call.1} parent=1 // pred_fallthru
      _
    // Predicated region
    $region34: #{tpu_custom_call.1} parent=1 // pred_check
      _
    $region35: #{tpu_custom_call.1} parent=1 // pred_check_branch
      %160 = sbr.rel (0) target = $region37
    $region36: #{tpu_custom_call.1} parent=1 // pred_region
      %161 = dma.done [#allocation4], 384
    $region37: #{tpu_custom_call.1} parent=1 // pred_fallthru
      _
    %162 = vsyncpa [#allocation3], 1
    %163 = vsyncpa [#allocation6], 1
    %164 = vsyncpa [#allocation4], 1

</llo_original>
